<compile_context>
chip_gen: v7x
topology: tpu7x:2x2x1
jax: 0.10.0
libtpu: 0.0.40
codegen_flags: <defaults>
</compile_context>

<pallas_src>
import functools

import jax
import jax.numpy as jnp
from jax import lax
from jax.experimental import pallas as pl
from jax.experimental.pallas import tpu as pltpu

_LANE = 128


def _cdiv(a, b):
    return -(-a // b)


def _round_up(a, b):
    return _cdiv(a, b) * b


# ---------------------------------------------------------------------------
# Pallas kernel: fused 1x1 conv (per-batch MXU matmul) + bias, NCHW output
# ---------------------------------------------------------------------------
def _outconv_kernel(x_ref, w_ref, b_ref, o_ref, *, nb):
    # x_ref: (nb, Cin, T_hw)   activation block
    # w_ref: (Cout, Cin)       1x1 conv weight (VMEM-resident across steps)
    # b_ref: (Cout, 1)         bias (broadcast over lanes)
    # o_ref: (nb, Cout, T_hw)  output block (NCHW order, lane-dense)
    w = w_ref[...]
    b = b_ref[...]
    for bi in range(nb):  # nb is static -> unrolled matmuls, no transposes
        y = jnp.dot(w, x_ref[bi], preferred_element_type=jnp.float32)
        o_ref[bi] = (y + b).astype(o_ref.dtype)


# ---------------------------------------------------------------------------
# Tile selection (all Python ints at trace time)
# ---------------------------------------------------------------------------
def _choose_tiles(n, cin, cout, hw, itemsize):
    # Lane-dense H*W tile: multiple of 128, sized so a single batch element's
    # x+y traffic per step is ~4 MiB (capped at 8192 lanes / full extent).
    hw_lane = _round_up(hw, _LANE)
    row_bytes = (cin + cout) * itemsize
    t_hw = ((4 * 1024 * 1024) // max(row_bytes, 1)) // _LANE * _LANE
    t_hw = max(_LANE, min(hw_lane, t_hw, 8192))

    # Batch block: double-buffered x+y blocks stay within ~32 MiB, leaving
    # headroom below the 48 MiB scoped-VMEM limit on every generation (v7x
    # has only 64 MiB physical VMEM per TensorCore).
    per_batch_block = 2 * row_bytes * t_hw
    nb = max(1, min(n, 8, (32 * 1024 * 1024) // max(per_batch_block, 1)))

    # Keep >= 2 grid steps when possible (v7x megacore sharding + pipelining).
    hw_steps = _round_up(hw, t_hw) // t_hw
    while nb > 1 and _cdiv(n, nb) * hw_steps < 2:
        nb = _cdiv(nb, 2)
    return nb, t_hw


# ---------------------------------------------------------------------------
# Wrapper
# ---------------------------------------------------------------------------
@jax.jit
def outconv_forward(x_nchw, weight_oi11, bias_o):
    n, cin, h, w = x_nchw.shape
    cout = weight_oi11.shape[0]
    hw = h * w
    itemsize = jnp.dtype(x_nchw.dtype).itemsize

    nb, t_hw = _choose_tiles(n, cin, cout, hw, itemsize)
    hw_pad = _round_up(hw, t_hw)
    n_pad = _round_up(n, nb)

    # Free, contiguous reshapes; zero-pad only when needed so every grid step
    # sees full, lane-dense blocks (padding is sliced off afterwards).
    x = x_nchw.reshape(n, cin, hw)
    if (hw_pad != hw) or (n_pad != n):
        x = jnp.pad(x, ((0, n_pad - n), (0, 0), (0, hw_pad - hw)))
    wm = weight_oi11.reshape(cout, cin)
    b = bias_o.reshape(cout, 1)

    grid = (n_pad // nb, hw_pad // t_hw)

    cost = pl.CostEstimate(
        flops=2 * n * cout * cin * hw,
        transcendentals=0,
        bytes_accessed=(n * cin * hw + n * cout * hw + cout * cin + cout)
        * itemsize,
    )

    out = pl.pallas_call(
        functools.partial(_outconv_kernel, nb=nb),
        grid=grid,
        out_shape=jax.ShapeDtypeStruct((n_pad, cout, hw_pad), x_nchw.dtype),
        in_specs=[
            # activations: blocked over batch and H*W
            pl.BlockSpec((nb, cin, t_hw), lambda i, j: (i, 0, j)),
            # weights / bias: same block every step -> stay VMEM-resident
            pl.BlockSpec((cout, cin), lambda i, j: (0, 0)),
            pl.BlockSpec((cout, 1), lambda i, j: (0, 0)),
        ],
        out_specs=pl.BlockSpec((nb, cout, t_hw), lambda i, j: (i, 0, j)),
        compiler_params=pltpu.CompilerParams(
            dimension_semantics=("parallel", "parallel"),
            vmem_limit_bytes=48 * 1024 * 1024,
        ),
        cost_estimate=cost,
    )(x, wm, b)

    out = out[:n, :, :hw]
    return out.reshape(n, cout, h, w)


# ---------------------------------------------------------------------------
# Pure-JAX reference (independent path via lax.conv_general_dilated)
# ---------------------------------------------------------------------------
def outconv_reference(x, weight, bias):
    y = lax.conv_general_dilated(
        x, weight, window_strides=(1, 1), padding='VALID',
        dimension_numbers=('NCHW', 'OIHW', 'NCHW'))
    return y + bias.reshape(1, -1, 1, 1)


if __name__ == "__main__":
    key = jax.random.PRNGKey(0)
    kx, kw, kb = jax.random.split(key, 3)

    batch, in_channels, out_channels, spatial = 2, 4, 8, 16
    x = jax.random.normal(kx, (batch, in_channels, spatial, spatial),
                          jnp.float32)
    weight = jax.random.normal(
        kw, (out_channels, in_channels, 1, 1), jnp.float32) * 0.1
    bias = jax.random.normal(kb, (out_channels,), jnp.float32) * 0.1

    out = jax.block_until_ready(outconv_forward(x, weight, bias))
    ref = outconv_reference(x, weight, bias)
    assert out.shape == ref.shape == (batch, out_channels, spatial, spatial), \
        out.shape
    assert bool(jnp.all(jnp.isfinite(out)))
    assert bool(jnp.allclose(out, ref, atol=1e-4, rtol=1e-4)), \
        float(jnp.max(jnp.abs(out - ref)))

    # Non-multiple-of-128 H*W (14x14 = 196) exercises the lane-dense
    # pad-and-slice path.
    x2 = jax.random.normal(kx, (batch, in_channels, 14, 14), jnp.float32)
    out2 = jax.block_until_ready(outconv_forward(x2, weight, bias))
    ref2 = outconv_reference(x2, weight, bias)
    assert out2.shape == ref2.shape
    assert bool(jnp.allclose(out2, ref2, atol=1e-4, rtol=1e-4)), \
        float(jnp.max(jnp.abs(out2 - ref2)))

    print("KERNEL_OK")
</pallas_src>

<mosaic_0001>
module attributes {stable_mosaic.version = 11 : i64} {
  func.func @_outconv_kernel(%arg0: i32, %arg1: i32, %arg2: memref<1x4x256xf32, #tpu.memory_space<vmem>>, %arg3: memref<8x4xf32, #tpu.memory_space<vmem>>, %arg4: memref<8x1xf32, #tpu.memory_space<vmem>>, %arg5: memref<1x8x256xf32, #tpu.memory_space<vmem>>) attributes {dimension_semantics = [#tpu.dimension_semantics<parallel>, #tpu.dimension_semantics<parallel>], iteration_bounds = array<i64: 2, 1>, scalar_prefetch = 0 : i64, scratch_operands = 0 : i64, tpu.core_type = #tpu.core_type<tc>, window_params = [{transform_indices = @transform_0, window_bounds = array<i64: 1, 4, 256>}, {pipeline_mode = #tpu.pipeline_mode<synchronous>, transform_indices = @transform_1, window_bounds = array<i64: 8, 4>}, {pipeline_mode = #tpu.pipeline_mode<synchronous>, transform_indices = @transform_2, window_bounds = array<i64: 8, 1>}, {transform_indices = @transform_3, window_bounds = array<i64: 1, 8, 256>}]} {
    %c0 = arith.constant 0 : index
    %c0_0 = arith.constant 0 : index
    %0 = vector.load %arg3[%c0, %c0_0] : memref<8x4xf32, #tpu.memory_space<vmem>>, vector<8x4xf32>
    %c0_1 = arith.constant 0 : index
    %c0_2 = arith.constant 0 : index
    %1 = vector.load %arg4[%c0_1, %c0_2] : memref<8x1xf32, #tpu.memory_space<vmem>>, vector<8x1xf32>
    %c0_3 = arith.constant 0 : index
    %c0_4 = arith.constant 0 : index
    %c0_5 = arith.constant 0 : index
    %2 = vector.load %arg2[%c0_3, %c0_4, %c0_5] : memref<1x4x256xf32, #tpu.memory_space<vmem>>, vector<1x4x256xf32>
    %3 = vector.shape_cast %2 : vector<1x4x256xf32> to vector<4x256xf32>
    %cst = arith.constant dense<0.000000e+00> : vector<8x256xf32>
    %4 = tpu.matmul %0, %3, %cst {dimension_numbers = #tpu.dot_dimension_numbers<[1], [0], [0], [1], [0, 0, 1, 1], [], []>} : vector<8x4xf32>, vector<4x256xf32>, vector<8x256xf32> -> vector<8x256xf32>
    %5 = vector.broadcast %1 : vector<8x1xf32> to vector<8x256xf32>
    %6 = arith.addf %4, %5 : vector<8x256xf32>
    %c0_6 = arith.constant 0 : index
    %c0_7 = arith.constant 0 : index
    %c0_8 = arith.constant 0 : index
    %7 = vector.load %arg5[%c0_6, %c0_7, %c0_8] : memref<1x8x256xf32, #tpu.memory_space<vmem>>, vector<1x8x256xf32>
    %8 = vector.shape_cast %7 : vector<1x8x256xf32> to vector<8x256xf32>
    %9 = vector.shape_cast %6 : vector<8x256xf32> to vector<1x8x256xf32>
    tpu.vector_store %arg5[%c0_6, %c0_7, %c0_8], %9 {strides = array<i32>} : memref<1x8x256xf32, #tpu.memory_space<vmem>>, vector<1x8x256xf32>,
    return
  }
  func.func @transform_0(%arg0: i32, %arg1: i32) -> (i32, i32, i32) {
    %c0_i32 = arith.constant 0 : i32
    %c0_i32_0 = arith.constant 0 : i32
    return %arg0, %c0_i32, %arg1 : i32, i32, i32
  }
  func.func @transform_1(%arg0: i32, %arg1: i32) -> (i32, i32) {
    %c0_i32 = arith.constant 0 : i32
    %c0_i32_0 = arith.constant 0 : i32
    %c0_i32_1 = arith.constant 0 : i32
    return %c0_i32, %c0_i32_0 : i32, i32
  }
  func.func @transform_2(%arg0: i32, %arg1: i32) -> (i32, i32) {
    %c0_i32 = arith.constant 0 : i32
    %c0_i32_0 = arith.constant 0 : i32
    %c0_i32_1 = arith.constant 0 : i32
    return %c0_i32, %c0_i32_0 : i32, i32
  }
  func.func @transform_3(%arg0: i32, %arg1: i32) -> (i32, i32, i32) {
    %c0_i32 = arith.constant 0 : i32
    %c0_i32_0 = arith.constant 0 : i32
    return %arg0, %c0_i32, %arg1 : i32, i32, i32
  }
}

</mosaic_0001>

<llo_original>
// kernel: outconv_forward.1
$region0: #{outconv_forward.1}
  #allocation0 [shape = 'u32[]', space=smem, size = 0x4, offset = 0x4, fixed_abs, tag = 'smem constant byte address 0x4 - core index']
  #allocation1 [shape = 'u32[144,128]{1,0:T(1,128)}', space=vmem, size = 0x12000, scoped, tag = 'internal scratch']
  %s0 = inlined_call_operand.vmem [shape: f32[2,4,256], index: 0, kind: input, shape index: {}]
  %s1 = inlined_call_operand.vmem [shape: f32[8,4], index: 1, kind: input, shape index: {}]
  %s2 = inlined_call_operand.vmem [shape: f32[8,1], index: 2, kind: input, shape index: {}]
  %s3 = inlined_call_operand.vmem [shape: f32[2,8,256], index: 3, kind: output, shape index: {}]
  %s4 = sld [smem:[#allocation0]]
  $region45: #{outconv_forward.1} parent=0
    _
  %s6 = ssub.s32 1, %s4
  %s7 = scalar_select 0, %s6, %s4
  loop: start=0, step=1, limit=4
  $region2: #{outconv_forward.1} parent=0 // loop_pre_header
    _
  $region3: #{outconv_forward.1} parent=0 // loop_header
    %s9 = sphi 0, %s13
    %p10 = scmp.ge.s32.totalorder %s9, 4
    %s16 = sphi 0, %s28
    %s17 = sphi 0, %s24
    %s18 = sphi 0, %s16
    %s19 = sphi 0, %s17
    %s20 = sphi 0, %s18
    %s21 = sphi 0, %s19
    %s33 = sphi 0, %s35
    %s36 = sphi 0, %s33
    %s37 = sphi 0, %s36
    %s53 = sphi 0, %s37
    %s57 = sphi 0, %s57
    %s59 = sphi 0, %s57
    %s60 = sphi 0, %s59
    %s74 = sphi 0, %s60
    %s78 = sphi 0, %s78
    %s80 = sphi 0, %s78
    %s81 = sphi 0, %s80
    %s95 = sphi 0, %s81
    %s103 = sphi 0, %s105
    %s106 = sphi 0, %s103
    %s107 = sphi 0, %s106
    %s123 = sphi 0, %s107
  $region4: #{outconv_forward.1} parent=0 // loop_header_branch
    %12 = sbr.rel (%p10) target = $region8
  $region5: #{outconv_forward.1} parent=0 // loop_body
    %s14 = ssub.s32 %s9, 1
    %s15 = ssub.s32 %s9, 2
    %s22 = sadd.s32 1, %s17
    %p23 = scmp.ge.s32.totalorder %s22, 1
    %s24 = scalar_select %p23, 0, %s22
    %s25 = sadd.s32 1, %s16
    %s26 = scalar_select %p23, %s25, %s16
    %p27 = scmp.ge.s32.totalorder %s26, 2
    %s28 = scalar_select %p27, 0, %s26
    %s29 = ssub.s32 %s16, %s28
    %s30 = ssub.s32 %s17, %s24
    %s31 = sor.u32 %s29, %s30
    %p32 = scmp.eq.s32.totalorder %s31, 0
    %s34 = sadd.s32 %s33, 1
    %s35 = scalar_select %p32, %s33, %s34
    %p38 = pneg %p32
    %p39 = scmp.eq.s32.totalorder %s9, 1
    %p40 = por %p38, %p39
    %p41 = scmp.ne.s32.totalorder %s33, %s36
    %p42 = scmp.eq.s32.totalorder %s9, 0
    %p43 = por %p41, %p42
    %p44 = scmp.ne.s32.totalorder %s33, %s36
    %p45 = scmp.eq.s32.totalorder %s14, 1
    %p46 = por %p44, %p45
    %p47 = scmp.ne.s32.totalorder %s36, %s37
    %p48 = scmp.eq.s32.totalorder %s14, 0
    %p49 = por %p47, %p48
    %p50 = scmp.ne.s32.totalorder %s36, %s37
    %p51 = scmp.eq.s32.totalorder %s15, 1
    %p52 = por %p50, %p51
    %p54 = scmp.ne.s32.totalorder %s37, %s53
    %p55 = scmp.eq.s32.totalorder %s15, 0
    %p56 = por %p54, %p55
    %s58 = sadd.s32 %s57, 1
    %p61 = scmp.eq.s32.totalorder %s9, 1
    %p62 = scmp.ne.s32.totalorder %s57, %s59
    %p63 = scmp.eq.s32.totalorder %s9, 0
    %p64 = por %p62, %p63
    %p65 = scmp.ne.s32.totalorder %s57, %s59
    %p66 = scmp.eq.s32.totalorder %s14, 1
    %p67 = por %p65, %p66
    %p68 = scmp.ne.s32.totalorder %s59, %s60
    %p69 = scmp.eq.s32.totalorder %s14, 0
    %p70 = por %p68, %p69
    %p71 = scmp.ne.s32.totalorder %s59, %s60
    %p72 = scmp.eq.s32.totalorder %s15, 1
    %p73 = por %p71, %p72
    %p75 = scmp.ne.s32.totalorder %s60, %s74
    %p76 = scmp.eq.s32.totalorder %s15, 0
    %p77 = por %p75, %p76
    %s79 = sadd.s32 %s78, 1
    %p82 = scmp.eq.s32.totalorder %s9, 1
    %p83 = scmp.ne.s32.totalorder %s78, %s80
    %p84 = scmp.eq.s32.totalorder %s9, 0
    %p85 = por %p83, %p84
    %p86 = scmp.ne.s32.totalorder %s78, %s80
    %p87 = scmp.eq.s32.totalorder %s14, 1
    %p88 = por %p86, %p87
    %p89 = scmp.ne.s32.totalorder %s80, %s81
    %p90 = scmp.eq.s32.totalorder %s14, 0
    %p91 = por %p89, %p90
    %p92 = scmp.ne.s32.totalorder %s80, %s81
    %p93 = scmp.eq.s32.totalorder %s15, 1
    %p94 = por %p92, %p93
    %p96 = scmp.ne.s32.totalorder %s81, %s95
    %p97 = scmp.eq.s32.totalorder %s15, 0
    %p98 = por %p96, %p97
    %s99 = ssub.s32 %s16, %s28
    %s100 = ssub.s32 %s17, %s24
    %s101 = sor.u32 %s99, %s100
    %p102 = scmp.eq.s32.totalorder %s101, 0
    %s104 = sadd.s32 %s103, 1
    %s105 = scalar_select %p102, %s103, %s104
    %p108 = pneg %p102
    %p109 = scmp.eq.s32.totalorder %s9, 1
    %p110 = por %p108, %p109
    %p111 = scmp.ne.s32.totalorder %s103, %s106
    %p112 = scmp.eq.s32.totalorder %s9, 0
    %p113 = por %p111, %p112
    %p114 = scmp.ne.s32.totalorder %s103, %s106
    %p115 = scmp.eq.s32.totalorder %s14, 1
    %p116 = por %p114, %p115
    %p117 = scmp.ne.s32.totalorder %s106, %s107
    %p118 = scmp.eq.s32.totalorder %s14, 0
    %p119 = por %p117, %p118
    %p120 = scmp.ne.s32.totalorder %s106, %s107
    %p121 = scmp.eq.s32.totalorder %s15, 1
    %p122 = por %p120, %p121
    %p124 = scmp.ne.s32.totalorder %s107, %s123
    %p125 = scmp.eq.s32.totalorder %s15, 0
    %p126 = por %p124, %p125
    %p127 = scmp.le.s32.totalorder 1, %s9
    %p128 = scmp.lt.s32.totalorder %s9, 3
    %p129 = pnand %p127, %p128
    %p130 = pneg %p129
    // Predicated region
    $region9: #{outconv_forward.1} parent=5 // pred_check
      _
    $region10: #{outconv_forward.1} parent=5 // pred_check_branch
      %132 = sbr.rel (%p129) target = $region12
    $region11: #{outconv_forward.1} parent=5 // pred_region
      %s133 = ssub.s32 %s9, 1
      // Predicated region
      $region13: #{outconv_forward.1} parent=11 // pred_check
        %p134 = pneg %p70
      $region14: #{outconv_forward.1} parent=11 // pred_check_branch
        %136 = sbr.rel (%p134) target = $region16
      $region15: #{outconv_forward.1} parent=11 // pred_region
        _
      $region16: #{outconv_forward.1} parent=11 // pred_fallthru
        _
      // Predicated region
      $region17: #{outconv_forward.1} parent=11 // pred_check
        %p137 = pneg %p91
      $region18: #{outconv_forward.1} parent=11 // pred_check_branch
        %139 = sbr.rel (%p137) target = $region20
      $region19: #{outconv_forward.1} parent=11 // pred_region
        _
      $region20: #{outconv_forward.1} parent=11 // pred_fallthru
        _
    $region12: #{outconv_forward.1} parent=5 // pred_fallthru
      _
    %p140 = scmp.lt.s32.totalorder %s9, 2
    // Predicated region
    $region21: #{outconv_forward.1} parent=5 // pred_check
      %p141 = pneg %p140
    $region22: #{outconv_forward.1} parent=5 // pred_check_branch
      %143 = sbr.rel (%p141) target = $region24
    $region23: #{outconv_forward.1} parent=5 // pred_region
      // Predicated region
      $region25: #{outconv_forward.1} parent=23 // pred_check
        %p144 = pneg %p43
      $region26: #{outconv_forward.1} parent=23 // pred_check_branch
        %146 = sbr.rel (%p144) target = $region28
      $region27: #{outconv_forward.1} parent=23 // pred_region
        %s147 = smul.u32 2, %s17
        %p148 = scmp.lt.s32.totalorder %s16, 1
        %s149 = scalar_select %p148, %s16, 1
        %p150 = scmp.lt.s32.totalorder %s147, 1
        %s151 = scalar_select %p150, %s147, 1
        %s152 = smul.addr %s149, 2
        %s153 = sadd.s32 %s151, %s152
        %s154 = smul.addr %s153, 4
        %s155 = scalar_lea.vmem %s0, %s154
        %s156 = smul.u32 2, %s17
      $region28: #{outconv_forward.1} parent=23 // pred_fallthru
        _
    $region24: #{outconv_forward.1} parent=5 // pred_fallthru
      _
    %p157 = scmp.le.s32.totalorder 1, %s9
    %p158 = scmp.lt.s32.totalorder %s9, 3
    %p159 = pnand %p157, %p158
    %p160 = pneg %p159
    // Predicated region
    $region29: #{outconv_forward.1} parent=5 // pred_check
      _
    $region30: #{outconv_forward.1} parent=5 // pred_check_branch
      %162 = sbr.rel (%p159) target = $region32
    $region31: #{outconv_forward.1} parent=5 // pred_region
      %s163 = ssub.s32 %s9, 1
      %s164 = smul.u32 2, %s19
      %p165 = scmp.lt.s32.totalorder %s18, 1
      %s166 = scalar_select %p165, %s18, 1
      %p167 = scmp.lt.s32.totalorder %s164, 1
      %s168 = scalar_select %p167, %s164, 1
      %s169 = smul.addr %s166, 2
      %s170 = sadd.s32 %s168, %s169
      %s171 = smul.addr %s170, 4
      %s172 = scalar_lea.vmem %s0, %s171
      %p173 = pneg %p49
      %p174 = pneg %p46
      %p175 = pneg %p70
      %p176 = pneg %p67
      %p177 = pneg %p91
      %p178 = pneg %p88
      %p179 = pneg %p119
      %p180 = pneg %p116
      %s181 = smul.u32 2, %s19
      %p182 = scmp.lt.s32.totalorder %s18, 1
      %s183 = scalar_select %p182, %s18, 1
      %p184 = scmp.lt.s32.totalorder %s181, 1
      %s185 = scalar_select %p184, %s181, 1
      %s186 = smul.addr %s183, 2
      %s187 = sadd.s32 %s185, %s186
      %s188 = smul.addr %s187, 8
      %s189 = scalar_lea.vmem %s3, %s188
      %s190 = smul.u32 2, %s19
      %p191 = scmp.lt.s32.totalorder %s18, 1
      %s192 = scalar_select %p191, %s18, 1
      %p193 = scmp.lt.s32.totalorder %s190, 1
      %s194 = scalar_select %p193, %s190, 1
      %s195 = smul.addr %s192, 2
      %s196 = sadd.s32 %s194, %s195
      %s197 = smul.addr %s196, 4
      %s198 = scalar_lea.vmem %s0, %s197
      %s199 = smul.u32 2, %s19
      %s200 = smul.u32 2, %s19
      %p201 = scmp.lt.s32.totalorder %s18, 1
      %s202 = scalar_select %p201, %s18, 1
      %p203 = scmp.lt.s32.totalorder %s200, 1
      %s204 = scalar_select %p203, %s200, 1
      %s205 = smul.addr %s202, 2
      %s206 = sadd.s32 %s204, %s205
      %s207 = smul.addr %s206, 8
      %s208 = scalar_lea.vmem %s3, %s207
      %s209 = smul.u32 2, %s19
      %v210 = vld [vmem:[%s1] sm:$0xff]
      %v211 = vld [vmem:[%s2] sm:$0xff]
      %v212 = vld [vmem:[%s198] sm:$0xff]
      %214 = vset.pattern.permute.xlu0 0
      %215 = vperm.xlu0 %214, %v211
      %v216 = vpop.permute.xlu0 %215
      %v219 = vcombine.high %v212, %v212
      %vm220 = vcmask 31744
      %v222 = vsel %vm220, %v210, 0
      %vm224 = vcmask 1043456
      %v225 = vsel %vm224, %v212, 0
      %v227 = vsel %vm224, %v219, 0
      %229 = vmatprep.subr.mxu0 %v227
      %230 = vmatpush1.msra.mxu0 %v225
      %231 = vmatprep.subr.mxu0 0.0
      %232 = vmatpush1.msra.mxu0 0.0
      %233 = vmatprep.subr.mxu0 0.0
      %234 = vmatpush1.msra.mxu0 0.0
      %235 = vmatprep.subr.mxu0 0.0
      %236 = vmatpush1.msra.mxu0 0.0
      %237 = vmatprep.subr.mxu0 0.0
      %238 = vmatpush1.msra.mxu0 0.0
      %239 = vmatprep.subr.mxu0 0.0
      %240 = vmatpush1.msra.mxu0 0.0
      %241 = vmatprep.subr.mxu0 0.0
      %242 = vmatpush1.msra.mxu0 0.0
      %243 = vmatprep.subr.mxu0 0.0
      %244 = vmatpush1.msra.mxu0 0.0
      %245 = vmatprep.subr.mxu0 0.0
      %246 = vmatpush1.msra.mxu0 0.0
      %247 = vmatprep.subr.mxu0 0.0
      %248 = vmatpush1.msra.mxu0 0.0
      %249 = vmatprep.subr.mxu0 0.0
      %250 = vmatpush1.msra.mxu0 0.0
      %251 = vmatprep.subr.mxu0 0.0
      %252 = vmatpush1.msra.mxu0 0.0
      %253 = vmatprep.subr.mxu0 0.0
      %254 = vmatpush1.msra.mxu0 0.0
      %255 = vmatprep.subr.mxu0 0.0
      %256 = vmatpush1.msra.mxu0 0.0
      %257 = vmatprep.subr.mxu0 0.0
      %258 = vmatpush1.msra.mxu0 0.0
      %259 = vmatprep.subr.mxu0 0.0
      %260 = vmatpush1.msra.mxu0 0.0
      %261 = vmatprep.subr.mxu0 0.0
      %262 = vmatpush1.msra.mxu0 0.0
      %263 = vmatprep.subr.mxu0 0.0
      %264 = vmatpush1.msra.mxu0 0.0
      %265 = vmatprep.subr.mxu0 0.0
      %266 = vmatpush1.msra.mxu0 0.0
      %267 = vmatprep.subr.mxu0 0.0
      %268 = vmatpush1.msra.mxu0 0.0
      %269 = vmatprep.subr.mxu0 0.0
      %270 = vmatpush1.msra.mxu0 0.0
      %271 = vmatprep.subr.mxu0 0.0
      %272 = vmatpush1.msra.mxu0 0.0
      %273 = vmatprep.subr.mxu0 0.0
      %274 = vmatpush1.msra.mxu0 0.0
      %275 = vmatprep.subr.mxu0 0.0
      %276 = vmatpush1.msra.mxu0 0.0
      %277 = vmatprep.subr.mxu0 0.0
      %278 = vmatpush1.msra.mxu0 0.0
      %279 = vmatprep.subr.mxu0 0.0
      %280 = vmatpush1.msra.mxu0 0.0
      %281 = vmatprep.subr.mxu0 0.0
      %282 = vmatpush1.msra.mxu0 0.0
      %283 = vmatprep.subr.mxu0 0.0
      %284 = vmatpush1.msra.mxu0 0.0
      %285 = vmatprep.subr.mxu0 0.0
      %286 = vmatpush1.msra.mxu0 0.0
      %287 = vmatprep.subr.mxu0 0.0
      %288 = vmatpush1.msra.mxu0 0.0
      %289 = vmatprep.subr.mxu0 0.0
      %290 = vmatpush1.msra.mxu0 0.0
      %291 = vmatprep.subr.mxu0 0.0
      %292 = vmatpush1.msra.mxu0 0.0
      %293 = vmatprep.mubr.f32.mxu0 0.0
      %294 = vmatmul.mubr.f32.gmra.mrb[0].mxu0 %v222
      %v295 = vpop.f32.mrb[0].mxu0
      %v296 = vadd.f32 %v216, %v295
      %v297 = vpop.f32.mrb[0].mxu0
      %v298 = vadd.f32 %v216, %v297
      %299 = vdwg.mxu0
      %300 = vst [vmem:[%s208] sm:$0xff] %v296
      %301 = vst [vmem:[%s208 + $0x8] sm:$0xff] %v298
      %s302 = smul.u32 2, %s19
      %p303 = scmp.lt.s32.totalorder %s18, 1
      %s304 = scalar_select %p303, %s18, 1
      %p305 = scmp.lt.s32.totalorder %s302, 1
      %s306 = scalar_select %p305, %s302, 1
      %s307 = smul.addr %s304, 2
      %s308 = sadd.s32 %s306, %s307
      %s309 = smul.addr %s308, 8
      %s310 = scalar_lea.vmem %s3, %s309
      // Predicated region
      $region33: #{outconv_forward.1} parent=31 // pred_check
        %p311 = pneg %p116
      $region34: #{outconv_forward.1} parent=31 // pred_check_branch
        %313 = sbr.rel (%p311) target = $region36
      $region35: #{outconv_forward.1} parent=31 // pred_region
        %s314 = smul.u32 2, %s19
      $region36: #{outconv_forward.1} parent=31 // pred_fallthru
        _
    $region32: #{outconv_forward.1} parent=5 // pred_fallthru
      _
    %p315 = scmp.le.s32.totalorder 2, %s9
    // Predicated region
    $region37: #{outconv_forward.1} parent=5 // pred_check
      %p316 = pneg %p315
    $region38: #{outconv_forward.1} parent=5 // pred_check_branch
      %318 = sbr.rel (%p316) target = $region40
    $region39: #{outconv_forward.1} parent=5 // pred_region
      %s319 = ssub.s32 %s9, 2
      // Predicated region
      $region41: #{outconv_forward.1} parent=39 // pred_check
        %p320 = pneg %p122
      $region42: #{outconv_forward.1} parent=39 // pred_check_branch
        %322 = sbr.rel (%p320) target = $region44
      $region43: #{outconv_forward.1} parent=39 // pred_region
        %s323 = smul.u32 2, %s21
        %p324 = scmp.lt.s32.totalorder %s20, 1
        %s325 = scalar_select %p324, %s20, 1
        %p326 = scmp.lt.s32.totalorder %s323, 1
        %s327 = scalar_select %p326, %s323, 1
        %s328 = smul.addr %s325, 2
        %s329 = sadd.s32 %s327, %s328
        %s330 = smul.addr %s329, 8
        %s331 = scalar_lea.vmem %s3, %s330
      $region44: #{outconv_forward.1} parent=39 // pred_fallthru
        _
    $region40: #{outconv_forward.1} parent=5 // pred_fallthru
      _
  $region6: #{outconv_forward.1} parent=0 // loop_footer
    %s13 = sadd.s32 1, %s9
  $region7: #{outconv_forward.1} parent=0 // loop_footer_branch
    %8 = sbr.rel target = $region3
  $region8: #{outconv_forward.1} parent=0 // loop_exit
    _

</llo_original>
